<compile_context>
chip_gen: v7x
topology: tpu7x:2x2x1
jax: 0.10.0
libtpu: 0.0.40
codegen_flags: <defaults>
</compile_context>

<pallas_src>
import functools
import math

import jax
import jax.numpy as jnp
from jax.experimental import pallas as pl
from jax.experimental.pallas import tpu as pltpu


def _round_up(v, m):
    return (v + m - 1) // m * m


def _vmem_capacity_bytes():
    """Physical VMEM per core; conservative v7x fallback if the query fails."""
    try:
        info = pltpu.get_tpu_info()
        cap = getattr(info, "vmem_capacity_bytes", None)
        if cap:
            return int(cap)
    except Exception:
        pass
    return 64 * 1024 * 1024


def _notears_sobolev_kernel(x_ref, w_ref, y_ref, l2_ref, xpad_ref, *, k, d):
    """Process one (tile_n, d) row tile of x.

    x_ref : (tile_n, d)        f32   input rows (native width, no HBM padding)
    w_ref : (k, d_pad, d_pad)  bf16  fused weight, [kk, j, i] = W[i, j*k+kk]
    y_ref : (tile_n, d)        f32   output rows
    l2_ref: (8, 128)           f32   elementwise partial of sum(y**2) for this tile
    xpad  : (tile_n, d_pad)    f32   scratch used to widen x to lane-aligned width
    """
    tile_n, d_pad = xpad_ref.shape

    # Widen x from d to d_pad lanes inside VMEM (pad cols stay 0 -> sin(0)=0,
    # and the corresponding weight rows are zero anyway).
    if d == d_pad:
        x = x_ref[...].astype(jnp.float32)
    else:
        xpad_ref[...] = jnp.zeros_like(xpad_ref)
        xpad_ref[:, :d] = x_ref[...].astype(jnp.float32)
        x = xpad_ref[...]

    # x / mu_kk = (2kk+1) * t  with  t = x * pi/2.
    # Odd-harmonic recurrence: u_m = sin((2m+1)t),
    #   u_{m+1} = 2*cos(2t)*u_m - u_{m-1},  u_0 = sin(t),  u_{-1} = -sin(t)
    # -> a single jnp.sin per element; cos(2t) = 1 - 2*sin(t)^2 (no extra EUP op).
    # TODO(synk): rounding error of the recurrence grows ~linearly with k; fine
    # for the small k used by NOTEARS, re-check against direct sin for large k.
    t = x * (math.pi / 2.0)
    s = jnp.sin(t)
    c2 = 1.0 - 2.0 * s * s
    u_prev = -s
    u_cur = s

    # k accumulating bf16 MXU dots; each psi_kk is consumed as it is produced
    # (no basis-slab store/reload). f32 accumulation.
    acc = jnp.zeros((tile_n, d_pad), jnp.float32)
    for kk in range(k):                                   # k small & static -> unrolled
        mu = 2.0 / ((2 * kk + 1) * math.pi)
        psi = (mu * u_cur).astype(jnp.bfloat16)           # (tile_n, d_pad) bf16
        acc = acc + jnp.dot(psi, w_ref[kk], preferred_element_type=jnp.float32)
        if kk + 1 < k:
            u_next = 2.0 * c2 * u_cur - u_prev
            u_prev, u_cur = u_cur, u_next

    # Store y at native width d (pad columns of acc are exactly zero).
    y_ref[...] = acc[:, :d].astype(y_ref.dtype)

    # Elementwise (8,128) partial of sum(y**2): VPU adds over row/lane blocks,
    # no in-kernel cross-lane reduce; final reduction happens in XLA.
    ysq = acc * acc
    part = jnp.zeros((8, 128), jnp.float32)
    for lb in range(d_pad // 128):
        blk = ysq[:, lb * 128:(lb + 1) * 128]             # (tile_n, 128)
        part = part + blk.reshape(tile_n // 8, 8, 128).sum(axis=0)
    l2_ref[...] = part


def notears_sobolev_forward(x, w_pos, w_neg, k, tile_n=None):
    """Returns (y, l2_reg_store) matching the PyTorch module's forward."""
    n, d = x.shape
    assert w_pos.shape == (d, d * k) and w_neg.shape == (d, d * k)

    d_pad = _round_up(d, 128)                   # MXU-aligned contraction/output width

    # --- VMEM budget -> vmem_limit + tile_n (per-generation sizing) -----------
    vmem_cap = _vmem_capacity_bytes()           # 64 MiB on v7x, 128 MiB on v5e/v6e
    vmem_limit = min(int(vmem_cap * 0.87), 100 * 1024 * 1024)

    w_bytes = k * d_pad * d_pad * 2             # bf16 weight, single-buffered
    # per-row VMEM: x,y blocks double-buffered (width d, f32) + xpad scratch +
    # ~6 live f32 (tile_n, d_pad) temporaries (s, c2, u_prev, u_cur, acc, ysq).
    bytes_per_row = 4 * 4 * d + 7 * 4 * d_pad
    if tile_n is None:
        budget = int(vmem_limit * 0.75)
        avail = max(budget - w_bytes, 8 * bytes_per_row)
        tile_n = min(4096, avail // bytes_per_row)

    n_ceil8 = _round_up(max(n, 1), 8)
    tile_n = min(int(tile_n), n_ceil8)
    # >=2 grid tiles when n allows, so dimension_semantics=("parallel",) can
    # actually shard row tiles across v7x's 2 TensorCores.
    if n_ceil8 >= 16:
        tile_n = min(tile_n, _round_up((n_ceil8 + 1) // 2, 8))
    tile_n = max(8, (tile_n // 8) * 8)

    n_pad = _round_up(n, tile_n)
    num_tiles = n_pad // tile_n

    # --- inputs ---------------------------------------------------------------
    # x stays at native width d (no 128-lane HBM inflation); only row-pad to a
    # multiple of tile_n. Zero rows give sin(0)=0 -> contribute 0 to y and l2.
    x_f32 = x.astype(jnp.float32)
    if n_pad != n:
        x_f32 = jnp.zeros((n_pad, d), jnp.float32).at[:n, :].set(x_f32)

    # Fused kk-major weight (bf16): w_fused[kk, j, i] = (W_pos - W_neg)[i, j*k + kk]
    # so that  y = sum_kk psi_kk @ w_fused[kk]  ==  bases @ (W_pos - W_neg).T
    w_eff = (w_pos - w_neg).astype(jnp.float32)                    # (d, d*k)
    w3 = jnp.transpose(w_eff.reshape(d, d, k), (2, 1, 0))          # (k, j, i)
    w_fused = (jnp.zeros((k, d_pad, d_pad), jnp.float32)
               .at[:, :d, :d].set(w3)).astype(jnp.bfloat16)

    kernel = functools.partial(_notears_sobolev_kernel, k=k, d=d)

    cost = pl.CostEstimate(
        flops=2 * n_pad * d_pad * d_pad * k + 10 * n_pad * d_pad,
        transcendentals=n_pad * d_pad,                             # one sin per element
        bytes_accessed=(4 * n_pad * d            # x read
                        + 4 * n_pad * d          # y write
                        + 2 * k * d_pad * d_pad  # bf16 weight
                        + 4 * num_tiles * 8 * 128),
    )

    y_out, l2_parts = pl.pallas_call(
        kernel,
        out_shape=(
            jax.ShapeDtypeStruct((n_pad, d), jnp.float32),
            jax.ShapeDtypeStruct((num_tiles * 8, 128), jnp.float32),
        ),
        grid_spec=pltpu.PrefetchScalarGridSpec(
            num_scalar_prefetch=0,
            grid=(num_tiles,),
            in_specs=[
                # x row tile at native width d (block last dim == full array dim)
                pl.BlockSpec((tile_n, d), lambda i: (i, 0)),
                # resident fused weight: constant index_map -> single-buffer it
                pl.BlockSpec((k, d_pad, d_pad), lambda i: (0, 0, 0),
                             pipeline_mode=pl.Buffered(buffer_count=1)),
            ],
            out_specs=(
                pl.BlockSpec((tile_n, d), lambda i: (i, 0)),       # y row tile
                pl.BlockSpec((8, 128), lambda i: (i, 0)),          # l2 partial block
            ),
            scratch_shapes=[pltpu.VMEM((tile_n, d_pad), jnp.float32)],  # x widening
        ),
        compiler_params=pltpu.CompilerParams(
            dimension_semantics=("parallel",),   # shard row tiles across v7x's 2 TCs
            vmem_limit_bytes=vmem_limit,
        ),
        cost_estimate=cost,
    )(x_f32, w_fused)

    y = y_out[:n]                                # f32, like the f32 PyTorch reference
    l2 = jnp.sum(l2_parts) / n                   # partials are genuine elementwise sums
    return y, l2


def _reference_forward(x, w_pos, w_neg, k):
    """Pure-JAX transcription of the PyTorch forward, for verification."""
    n, d = x.shape
    seq = []
    for kk in range(k):
        mu = 2.0 / (2 * kk + 1) / math.pi
        seq.append(mu * jnp.sin(x / mu))
    bases = jnp.stack(seq, axis=2).reshape(-1, d * k)   # (n, d*k)
    y = bases @ (w_pos - w_neg).T
    l2 = jnp.sum(y ** 2) / n
    return y, l2


if __name__ == "__main__":
    # Small shapes consistent with the module: d variables, k expansions, n samples.
    # d=5 exercises the in-kernel lane widening + narrow HBM blocks, n=30
    # exercises row padding; tile_n=8 exercises a multi-tile grid, tile_n=None
    # exercises the VMEM-budget / >=2-tile sizing path.
    d, k, n = 5, 3, 30

    key = jax.random.PRNGKey(0)
    kx, kp, kn = jax.random.split(key, 3)
    x = jax.random.normal(kx, (n, d), dtype=jnp.float32)

    # NOTE: the module's __init__ zero-inits fc1_pos/fc1_neg (forward would be
    # trivially zero); use deterministic random weights of the same shapes so
    # the matmul path is actually exercised.
    w_pos = 0.1 * jax.random.uniform(kp, (d, d * k), dtype=jnp.float32)
    w_neg = 0.1 * jax.random.uniform(kn, (d, d * k), dtype=jnp.float32)

    y_ref, l2_ref = _reference_forward(x, w_pos, w_neg, k)

    for tn in (8, None):
        y, l2 = notears_sobolev_forward(x, w_pos, w_neg, k, tile_n=tn)
        y = jax.block_until_ready(y)
        l2 = jax.block_until_ready(l2)
        assert y.shape == y_ref.shape, (y.shape, y_ref.shape)
        # bf16 MXU operands (f32 accumulation) -> loosened tolerance vs pure f32.
        assert jnp.allclose(y, y_ref, atol=2e-2, rtol=2e-2), (tn, y, y_ref)
        assert jnp.allclose(l2, l2_ref, atol=2e-2, rtol=2e-2), (tn, l2, l2_ref)

    print("KERNEL_OK")
</pallas_src>

<mosaic_0001>
module attributes {stable_mosaic.version = 11 : i64} {
  func.func @_notears_sobolev_kernel(%arg0: i32, %arg1: memref<8x5xf32, #tpu.memory_space<vmem>>, %arg2: memref<3x128x128xbf16, #tpu.memory_space<vmem>>, %arg3: memref<8x5xf32, #tpu.memory_space<vmem>>, %arg4: memref<8x128xf32, #tpu.memory_space<vmem>>, %arg5: memref<8x128xf32, #tpu.memory_space<vmem>>) attributes {dimension_semantics = [#tpu.dimension_semantics<parallel>], iteration_bounds = array<i64: 4>, scalar_prefetch = 0 : i64, scratch_operands = 1 : i64, tpu.core_type = #tpu.core_type<tc>, window_params = [{transform_indices = @transform_0, window_bounds = array<i64: 8, 5>}, {pipeline_mode = #tpu.pipeline_mode<synchronous>, transform_indices = @transform_1, window_bounds = array<i64: 3, 128, 128>}, {transform_indices = @transform_2, window_bounds = array<i64: 8, 5>}, {transform_indices = @transform_3, window_bounds = array<i64: 8, 128>}]} {
    %cst = arith.constant 0.000000e+00 : f32
    %0 = vector.broadcast %cst : f32 to vector<8x128xf32>
    %c0 = arith.constant 0 : index
    %c0_0 = arith.constant 0 : index
    %1 = vector.load %arg5[%c0, %c0_0] : memref<8x128xf32, #tpu.memory_space<vmem>>, vector<8x128xf32>
    tpu.vector_store %arg5[%c0, %c0_0], %0 {strides = array<i32>} : memref<8x128xf32, #tpu.memory_space<vmem>>, vector<8x128xf32>,
    %c0_1 = arith.constant 0 : index
    %c0_2 = arith.constant 0 : index
    %2 = vector.load %arg1[%c0_1, %c0_2] : memref<8x5xf32, #tpu.memory_space<vmem>>, vector<8x5xf32>
    %c0_3 = arith.constant 0 : index
    %c0_4 = arith.constant 0 : index
    %3 = vector.load %arg5[%c0_3, %c0_4] : memref<8x128xf32, #tpu.memory_space<vmem>>, vector<8x5xf32>
    tpu.vector_store %arg5[%c0_3, %c0_4], %2 {strides = array<i32>} : memref<8x128xf32, #tpu.memory_space<vmem>>, vector<8x5xf32>,
    %c0_5 = arith.constant 0 : index
    %c0_6 = arith.constant 0 : index
    %4 = vector.load %arg5[%c0_5, %c0_6] : memref<8x128xf32, #tpu.memory_space<vmem>>, vector<8x128xf32>
    %cst_7 = arith.constant 1.57079637 : f32
    %5 = vector.broadcast %cst_7 : f32 to vector<8x128xf32>
    %6 = arith.mulf %4, %5 : vector<8x128xf32>
    %7 = math.sin %6 : vector<8x128xf32>
    %cst_8 = arith.constant 2.000000e+00 : f32
    %8 = vector.broadcast %cst_8 : f32 to vector<8x128xf32>
    %9 = arith.mulf %8, %7 : vector<8x128xf32>
    %10 = arith.mulf %9, %7 : vector<8x128xf32>
    %cst_9 = arith.constant 1.000000e+00 : f32
    %11 = vector.broadcast %cst_9 : f32 to vector<8x128xf32>
    %12 = arith.subf %11, %10 : vector<8x128xf32>
    %cst_10 = arith.constant 0.000000e+00 : f32
    %13 = vector.broadcast %cst_10 : f32 to vector<8x128xf32>
    %14 = arith.subf %13, %7 : vector<8x128xf32>
    %cst_11 = arith.constant 0.000000e+00 : f32
    %15 = vector.broadcast %cst_11 : f32 to vector<8x128xf32>
    %cst_12 = arith.constant 0.636619746 : f32
    %16 = vector.broadcast %cst_12 : f32 to vector<8x128xf32>
    %17 = arith.mulf %16, %7 : vector<8x128xf32>
    %18 = arith.truncf %17 : vector<8x128xf32> to vector<8x128xbf16>
    %c0_13 = arith.constant 0 : index
    %c0_14 = arith.constant 0 : index
    %c0_15 = arith.constant 0 : index
    %19 = vector.load %arg2[%c0_13, %c0_14, %c0_15] : memref<3x128x128xbf16, #tpu.memory_space<vmem>>, vector<1x128x128xbf16>
    %20 = vector.shape_cast %19 : vector<1x128x128xbf16> to vector<128x128xbf16>
    %cst_16 = arith.constant dense<0.000000e+00> : vector<8x128xf32>
    %21 = tpu.matmul %18, %20, %cst_16 {dimension_numbers = #tpu.dot_dimension_numbers<[1], [0], [0], [1], [0, 0, 1, 1], [], []>} : vector<8x128xbf16>, vector<128x128xbf16>, vector<8x128xf32> -> vector<8x128xf32>
    %22 = arith.addf %15, %21 : vector<8x128xf32>
    %cst_17 = arith.constant 2.000000e+00 : f32
    %23 = vector.broadcast %cst_17 : f32 to vector<8x128xf32>
    %24 = arith.mulf %23, %12 : vector<8x128xf32>
    %25 = arith.mulf %24, %7 : vector<8x128xf32>
    %26 = arith.subf %25, %14 : vector<8x128xf32>
    %cst_18 = arith.constant 0.212206587 : f32
    %27 = vector.broadcast %cst_18 : f32 to vector<8x128xf32>
    %28 = arith.mulf %27, %26 : vector<8x128xf32>
    %29 = arith.truncf %28 : vector<8x128xf32> to vector<8x128xbf16>
    %c1 = arith.constant 1 : index
    %c0_19 = arith.constant 0 : index
    %c0_20 = arith.constant 0 : index
    %30 = vector.load %arg2[%c1, %c0_19, %c0_20] : memref<3x128x128xbf16, #tpu.memory_space<vmem>>, vector<1x128x128xbf16>
    %31 = vector.shape_cast %30 : vector<1x128x128xbf16> to vector<128x128xbf16>
    %cst_21 = arith.constant dense<0.000000e+00> : vector<8x128xf32>
    %32 = tpu.matmul %29, %31, %cst_21 {dimension_numbers = #tpu.dot_dimension_numbers<[1], [0], [0], [1], [0, 0, 1, 1], [], []>} : vector<8x128xbf16>, vector<128x128xbf16>, vector<8x128xf32> -> vector<8x128xf32>
    %33 = arith.addf %22, %32 : vector<8x128xf32>
    %cst_22 = arith.constant 2.000000e+00 : f32
    %34 = vector.broadcast %cst_22 : f32 to vector<8x128xf32>
    %35 = arith.mulf %34, %12 : vector<8x128xf32>
    %36 = arith.mulf %35, %26 : vector<8x128xf32>
    %37 = arith.subf %36, %7 : vector<8x128xf32>
    %cst_23 = arith.constant 0.127323955 : f32
    %38 = vector.broadcast %cst_23 : f32 to vector<8x128xf32>
    %39 = arith.mulf %38, %37 : vector<8x128xf32>
    %40 = arith.truncf %39 : vector<8x128xf32> to vector<8x128xbf16>
    %c2 = arith.constant 2 : index
    %c0_24 = arith.constant 0 : index
    %c0_25 = arith.constant 0 : index
    %41 = vector.load %arg2[%c2, %c0_24, %c0_25] : memref<3x128x128xbf16, #tpu.memory_space<vmem>>, vector<1x128x128xbf16>
    %42 = vector.shape_cast %41 : vector<1x128x128xbf16> to vector<128x128xbf16>
    %cst_26 = arith.constant dense<0.000000e+00> : vector<8x128xf32>
    %43 = tpu.matmul %40, %42, %cst_26 {dimension_numbers = #tpu.dot_dimension_numbers<[1], [0], [0], [1], [0, 0, 1, 1], [], []>} : vector<8x128xbf16>, vector<128x128xbf16>, vector<8x128xf32> -> vector<8x128xf32>
    %44 = arith.addf %33, %43 : vector<8x128xf32>
    %45 = vector.extract_strided_slice %44 {offsets = [0, 0], sizes = [8, 5], strides = [1, 1]} : vector<8x128xf32> to vector<8x5xf32>
    %c0_27 = arith.constant 0 : index
    %c0_28 = arith.constant 0 : index
    %46 = vector.load %arg3[%c0_27, %c0_28] : memref<8x5xf32, #tpu.memory_space<vmem>>, vector<8x5xf32>
    tpu.vector_store %arg3[%c0_27, %c0_28], %45 {strides = array<i32>} : memref<8x5xf32, #tpu.memory_space<vmem>>, vector<8x5xf32>,
    %47 = arith.mulf %44, %44 : vector<8x128xf32>
    %cst_29 = arith.constant 0.000000e+00 : f32
    %48 = vector.broadcast %cst_29 : f32 to vector<8x128xf32>
    %49 = vector.shape_cast %47 : vector<8x128xf32> to vector<1x8x128xf32>
    %cst_30 = arith.constant dense<0.000000e+00> : vector<8x128xf32>
    %50 = vector.multi_reduction <add>, %49, %cst_30 [0] : vector<1x8x128xf32> to vector<8x128xf32>
    %51 = arith.addf %48, %50 : vector<8x128xf32>
    %c0_31 = arith.constant 0 : index
    %c0_32 = arith.constant 0 : index
    %52 = vector.load %arg4[%c0_31, %c0_32] : memref<8x128xf32, #tpu.memory_space<vmem>>, vector<8x128xf32>
    tpu.vector_store %arg4[%c0_31, %c0_32], %51 {strides = array<i32>} : memref<8x128xf32, #tpu.memory_space<vmem>>, vector<8x128xf32>,
    return
  }
  func.func @transform_0(%arg0: i32) -> (i32, i32) {
    %c0_i32 = arith.constant 0 : i32
    %c0_i32_0 = arith.constant 0 : i32
    return %arg0, %c0_i32 : i32, i32
  }
  func.func @transform_1(%arg0: i32) -> (i32, i32, i32) {
    %c0_i32 = arith.constant 0 : i32
    %c0_i32_0 = arith.constant 0 : i32
    %c0_i32_1 = arith.constant 0 : i32
    %c0_i32_2 = arith.constant 0 : i32
    return %c0_i32, %c0_i32_0, %c0_i32_1 : i32, i32, i32
  }
  func.func @transform_2(%arg0: i32) -> (i32, i32) {
    %c0_i32 = arith.constant 0 : i32
    %c0_i32_0 = arith.constant 0 : i32
    return %arg0, %c0_i32 : i32, i32
  }
  func.func @transform_3(%arg0: i32) -> (i32, i32) {
    %c0_i32 = arith.constant 0 : i32
    %c0_i32_0 = arith.constant 0 : i32
    return %arg0, %c0_i32 : i32, i32
  }
}

</mosaic_0001>

<llo_original>
// kernel: tpu_custom_call.1
$region0: #{tpu_custom_call.1}
  #allocation0 [shape = 'u32[]', space=smem, size = 0x4, offset = 0x4, fixed_abs, tag = 'smem constant byte address 0x4 - core index']
  #allocation1 [shape = 'u32[144,128]{1,0:T(1,128)}', space=vmem, size = 0x12000, scoped, tag = 'internal scratch']
  #allocation2 [shape = 'f32[8,128]{1,0:T(8,128)}', space=vmem, size = 0x1000, scoped, tag = 'scratch operand']
  %s0 = inlined_call_operand.vmem [shape: f32[32,5], index: 0, kind: input, shape index: {}]
  %s1 = inlined_call_operand.hbm [shape: bf16[3,128,128], index: 1, kind: input, shape index: {}]
  %s2 = inlined_call_operand.vmem [shape: f32[32,5], index: 2, kind: output, shape index: {0}]
  %s3 = inlined_call_operand.hbm [shape: f32[32,128], index: 3, kind: output, shape index: {1}]
  %4 = xla_tuple %s2, %s3
  %s5 = sld [smem:[#allocation0]]
  $region53: #{tpu_custom_call.1} parent=0
    _
  %s7 = ssub.s32 1, %s5
  %s8 = scalar_select 0, %s7, %s5
  $region1: #{tpu_custom_call.1} parent=0
    #allocation3 [shape = 'u8[98304]{0}', space=vmem, size = 0x18000, scoped, tag = 'input window, operand 1, single buffered']
    #allocation4 [shape = 's32[2]{0}', space=sflag, size = 0x8, scoped, tag = 'scoped memory for tpu_custom_call.1']
    #allocation5 [shape = 's32[2]{0}', space=sflag, size = 0x8, scoped, tag = 'scoped memory for tpu_custom_call.1']
    #allocation6 [shape = 'u8[8192]{0}', space=vmem, size = 0x2000, scoped, tag = 'output window, operand 1']
    %9 = vsyncpa [#allocation4], 0
    %10 = vsyncpa [#allocation5], 0
    %s11 = scalar_lea.sflag [#allocation5], 1
    %12 = vsyncpa %s11, 0
    loop: start=0, step=1, limit=6
    $region2: #{tpu_custom_call.1} parent=1 // loop_pre_header
      _
    $region3: #{tpu_custom_call.1} parent=1 // loop_header
      %s14 = sphi 0, %s18
      %p15 = scmp.ge.s32.totalorder %s14, 6
      %s24 = sphi 0, %s26
      %s27 = sphi 0, %s24
      %s28 = sphi 0, %s27
      %s44 = sphi 0, %s28
      %s48 = sphi 0, %s48
      %s50 = sphi 0, %s48
      %s51 = sphi 0, %s50
      %s65 = sphi 0, %s51
      %s71 = sphi 0, %s73
      %s74 = sphi 0, %s71
      %s75 = sphi 0, %s74
      %s91 = sphi 0, %s75
      %s97 = sphi 0, %s99
      %s100 = sphi 0, %s97
      %s101 = sphi 0, %s100
      %s117 = sphi 0, %s101
    $region4: #{tpu_custom_call.1} parent=1 // loop_header_branch
      %17 = sbr.rel (%p15) target = $region8
    $region5: #{tpu_custom_call.1} parent=1 // loop_body
      %s19 = ssub.s32 %s14, 1
      %s20 = ssub.s32 %s14, 2
      %s21 = sadd.s32 %s14, 1
      %s22 = ssub.s32 %s14, %s21
      %p23 = scmp.eq.s32.totalorder %s22, 0
      %s25 = sadd.s32 %s24, 1
      %s26 = scalar_select %p23, %s24, %s25
      %p29 = pneg %p23
      %p30 = scmp.eq.s32.totalorder %s14, 3
      %p31 = por %p29, %p30
      %p32 = scmp.ne.s32.totalorder %s24, %s27
      %p33 = scmp.eq.s32.totalorder %s14, 0
      %p34 = por %p32, %p33
      %p35 = scmp.ne.s32.totalorder %s24, %s27
      %p36 = scmp.eq.s32.totalorder %s19, 3
      %p37 = por %p35, %p36
      %p38 = scmp.ne.s32.totalorder %s27, %s28
      %p39 = scmp.eq.s32.totalorder %s19, 0
      %p40 = por %p38, %p39
      %p41 = scmp.ne.s32.totalorder %s27, %s28
      %p42 = scmp.eq.s32.totalorder %s20, 3
      %p43 = por %p41, %p42
      %p45 = scmp.ne.s32.totalorder %s28, %s44
      %p46 = scmp.eq.s32.totalorder %s20, 0
      %p47 = por %p45, %p46
      %s49 = sadd.s32 %s48, 1
      %p52 = scmp.eq.s32.totalorder %s14, 3
      %p53 = scmp.ne.s32.totalorder %s48, %s50
      %p54 = scmp.eq.s32.totalorder %s14, 0
      %p55 = por %p53, %p54
      %p56 = scmp.ne.s32.totalorder %s48, %s50
      %p57 = scmp.eq.s32.totalorder %s19, 3
      %p58 = por %p56, %p57
      %p59 = scmp.ne.s32.totalorder %s50, %s51
      %p60 = scmp.eq.s32.totalorder %s19, 0
      %p61 = por %p59, %p60
      %p62 = scmp.ne.s32.totalorder %s50, %s51
      %p63 = scmp.eq.s32.totalorder %s20, 3
      %p64 = por %p62, %p63
      %p66 = scmp.ne.s32.totalorder %s51, %s65
      %p67 = scmp.eq.s32.totalorder %s20, 0
      %p68 = por %p66, %p67
      %s69 = ssub.s32 %s14, %s21
      %p70 = scmp.eq.s32.totalorder %s69, 0
      %s72 = sadd.s32 %s71, 1
      %s73 = scalar_select %p70, %s71, %s72
      %p76 = pneg %p70
      %p77 = scmp.eq.s32.totalorder %s14, 3
      %p78 = por %p76, %p77
      %p79 = scmp.ne.s32.totalorder %s71, %s74
      %p80 = scmp.eq.s32.totalorder %s14, 0
      %p81 = por %p79, %p80
      %p82 = scmp.ne.s32.totalorder %s71, %s74
      %p83 = scmp.eq.s32.totalorder %s19, 3
      %p84 = por %p82, %p83
      %p85 = scmp.ne.s32.totalorder %s74, %s75
      %p86 = scmp.eq.s32.totalorder %s19, 0
      %p87 = por %p85, %p86
      %p88 = scmp.ne.s32.totalorder %s74, %s75
      %p89 = scmp.eq.s32.totalorder %s20, 3
      %p90 = por %p88, %p89
      %p92 = scmp.ne.s32.totalorder %s75, %s91
      %p93 = scmp.eq.s32.totalorder %s20, 0
      %p94 = por %p92, %p93
      %s95 = ssub.s32 %s14, %s21
      %p96 = scmp.eq.s32.totalorder %s95, 0
      %s98 = sadd.s32 %s97, 1
      %s99 = scalar_select %p96, %s97, %s98
      %p102 = pneg %p96
      %p103 = scmp.eq.s32.totalorder %s14, 3
      %p104 = por %p102, %p103
      %p105 = scmp.ne.s32.totalorder %s97, %s100
      %p106 = scmp.eq.s32.totalorder %s14, 0
      %p107 = por %p105, %p106
      %p108 = scmp.ne.s32.totalorder %s97, %s100
      %p109 = scmp.eq.s32.totalorder %s19, 3
      %p110 = por %p108, %p109
      %p111 = scmp.ne.s32.totalorder %s100, %s101
      %p112 = scmp.eq.s32.totalorder %s19, 0
      %p113 = por %p111, %p112
      %p114 = scmp.ne.s32.totalorder %s100, %s101
      %p115 = scmp.eq.s32.totalorder %s20, 3
      %p116 = por %p114, %p115
      %p118 = scmp.ne.s32.totalorder %s101, %s117
      %p119 = scmp.eq.s32.totalorder %s20, 0
      %p120 = por %p118, %p119
      %p121 = scmp.le.s32.totalorder 1, %s14
      %p122 = scmp.lt.s32.totalorder %s14, 5
      %p123 = pnand %p121, %p122
      %p124 = pneg %p123
      // Predicated region
      $region9: #{tpu_custom_call.1} parent=5 // pred_check
        _
      $region10: #{tpu_custom_call.1} parent=5 // pred_check_branch
        %126 = sbr.rel (%p123) target = $region12
      $region11: #{tpu_custom_call.1} parent=5 // pred_region
        %s127 = ssub.s32 %s14, 1
        // Predicated region
        $region13: #{tpu_custom_call.1} parent=11 // pred_check
          %p128 = pneg %p61
        $region14: #{tpu_custom_call.1} parent=11 // pred_check_branch
          %130 = sbr.rel (%p128) target = $region16
        $region15: #{tpu_custom_call.1} parent=11 // pred_region
          %s132 = ssub.s32 3072, 3072
          %133 = vsyncadd [#allocation4], %s132
          %s134 = sshll.u32 [#allocation3], 4
          %s135 = int_to_ptr.vmem [resolvable:$true] %s134
          %140 = dma.hbm_to_vmem [thread:$0]  %s1, 3072, %s135, [#allocation4], 64, 64, 4
        $region16: #{tpu_custom_call.1} parent=11 // pred_fallthru
          _
      $region12: #{tpu_custom_call.1} parent=5 // pred_fallthru
        _
      %p141 = scmp.lt.s32.totalorder %s14, 4
      // Predicated region
      $region17: #{tpu_custom_call.1} parent=5 // pred_check
        %p142 = pneg %p141
      $region18: #{tpu_custom_call.1} parent=5 // pred_check_branch
        %144 = sbr.rel (%p142) target = $region20
      $region19: #{tpu_custom_call.1} parent=5 // pred_region
        // Predicated region
        $region21: #{tpu_custom_call.1} parent=19 // pred_check
          %p145 = pneg %p34
        $region22: #{tpu_custom_call.1} parent=19 // pred_check_branch
          %147 = sbr.rel (%p145) target = $region24
        $region23: #{tpu_custom_call.1} parent=19 // pred_region
          %p148 = scmp.lt.s32.totalorder %s14, 3
          %s149 = scalar_select %p148, %s14, 3
          %s150 = smul.addr %s149, 8
          %s151 = scalar_lea.vmem %s0, %s150
        $region24: #{tpu_custom_call.1} parent=19 // pred_fallthru
          _
      $region20: #{tpu_custom_call.1} parent=5 // pred_fallthru
        _
      %p152 = scmp.le.s32.totalorder 1, %s14
      %p153 = scmp.lt.s32.totalorder %s14, 5
      %p154 = pnand %p152, %p153
      %p155 = pneg %p154
      // Predicated region
      $region25: #{tpu_custom_call.1} parent=5 // pred_check
        _
      $region26: #{tpu_custom_call.1} parent=5 // pred_check_branch
        %157 = sbr.rel (%p154) target = $region28
      $region27: #{tpu_custom_call.1} parent=5 // pred_region
        %s158 = ssub.s32 %s14, 1
        // Predicated region
        $region29: #{tpu_custom_call.1} parent=27 // pred_check
          %p159 = pneg %p61
        $region30: #{tpu_custom_call.1} parent=27 // pred_check_branch
          %161 = sbr.rel (%p159) target = $region32
        $region31: #{tpu_custom_call.1} parent=27 // pred_region
          %162 = dma.done [#allocation4], 3072
        $region32: #{tpu_custom_call.1} parent=27 // pred_fallthru
          _
        %p163 = scmp.lt.s32.totalorder %s19, 3
        %s164 = scalar_select %p163, %s19, 3
        %s165 = smul.addr %s164, 8
        %s166 = scalar_lea.vmem %s0, %s165
        %p167 = pneg %p40
        %p168 = pneg %p37
        %p169 = pneg %p61
        %p170 = pneg %p58
        %p171 = pneg %p87
        %p172 = pneg %p84
        %p173 = scmp.lt.s32.totalorder %s19, 3
        %s174 = scalar_select %p173, %s19, 3
        %s175 = smul.addr %s174, 8
        %s176 = scalar_lea.vmem %s2, %s175
        %p177 = pneg %p113
        %p178 = pneg %p110
        %s179 = sand.u32 %s100, 1
        %s180 = scalar_lea.sflag [#allocation5], %s179
        %s181 = sand.u32 %s100, 1
        %s182 = smul.addr %s181, 8
        %s183 = scalar_lea.vmem [#allocation6], %s182
        %p184 = scmp.lt.s32.totalorder %s19, 3
        %s185 = scalar_select %p184, %s19, 3
        %s186 = smul.addr %s185, 8
        %s187 = scalar_lea.vmem %s0, %s186
        %p188 = scmp.lt.s32.totalorder %s19, 3
        %s189 = scalar_select %p188, %s19, 3
        %s190 = smul.addr %s189, 8
        %s191 = scalar_lea.vmem %s2, %s190
        %193 = vst [vmem:[#allocation2] sm:$0xff] 0.0
        %v194 = vld [vmem:[%s187] sm:$0xff]
        %vm195 = vcmask 39936
        %196 = vst.msk [vmem:[#allocation2] sm:$0xff] %vm195, %v194
        %v197 = vld [vmem:[#allocation2] sm:$0xff]
        %v198 = vmul.f32 %v197, 1.5707964
        %v199 = vand.u32 2147483647, %v198
        %vm200 = vcmp.le.f32.partialorder %v199, 0.7853982
        %vm201 = vcmp.lt.s32.totalorder %v198, 0
        %v202 = vand.u32 %v198, 2139095040
        %v203 = vshrl.u32 %v202, 23
        %v204 = vsub.s32 %v203, 127
        %v205 = vand.u32 2147483647, %v198
        %v206 = vand.u32 %v205, 8388607
        %v207 = vor.u32 %v206, 8388608
        %v208 = vsub.s32 0, %v207
        %v209 = vadd.s32 %v204, 1
        %vm210 = vcmp.gt.s32.totalorder %v209, 0
        %v211 = vsel %vm210, %v209, 0
        %v212 = vshrl.u32 %v211, 5
        %v213 = vand.u32 %v211, 31
        %v214 = vsub.s32 32, %v213
        %v215 = vshrl.u32 683565275, %v214
        %v216 = vshll.u32 683565275, %v213
        %v217 = vshrl.u32 2475754826, %v214
        %v218 = vor.u32 %v216, %v217
        %v219 = vshll.u32 2475754826, %v213
        %v220 = vshrl.u32 2131351028, %v214
        %v221 = vor.u32 %v219, %v220
        %v222 = vshll.u32 2131351028, %v213
        %v223 = vshrl.u32 2102212464, %v214
        %v224 = vor.u32 %v222, %v223
        %v225 = vshll.u32 2102212464, %v213
        %v226 = vshrl.u32 920167782, %v214
        %v227 = vor.u32 %v225, %v226
        %v228 = vshll.u32 920167782, %v213
        %v229 = vshrl.u32 1326507024, %v214
        %v230 = vor.u32 %v228, %v229
        %vm231 = vcmp.lt.s32.totalorder %v212, 1
        %vm232 = vcmp.lt.s32.totalorder %v212, 2
        %vm233 = vcmp.lt.s32.totalorder %v212, 3
        %vm234 = vcmp.lt.s32.totalorder %v212, 4
        %v235 = vsel %vm231, %v215, %v218
        %v236 = vsel %vm234, %v224, 2102212464
        %v237 = vsel %vm233, %v221, %v236
        %v238 = vsel %vm232, %v235, %v237
        %v239 = vsel %vm231, %v218, %v221
        %v240 = vsel %vm234, %v227, 920167782
        %v241 = vsel %vm233, %v224, %v240
        %v242 = vsel %vm232, %v239, %v241
        %v243 = vsel %vm231, %v221, %v224
        %v244 = vsel %vm234, %v230, 1326507024
        %v245 = vsel %vm233, %v227, %v244
        %v246 = vsel %vm232, %v243, %v245
        %v247 = vshll.u32 %v207, 8
        %v248 = vmul.u32.u64.compose %v247, %v246
        %v249 = vextract.low.u32 %v248
        %v250 = vextract.high.u32 %v248
        %v251 = vmul.u32.u64.compose %v247, %v242
        %v252 = vextract.low.u32 %v251
        %v253 = vextract.high.u32 %v251
        %v254 = vmul.u32 %v247, %v238
        %v255 = vadd.s32 %v250, %v252
        %vm256 = vc.u32 %v250, %v252
        %v257 = vadd.s32 %v253, 1
        %v258 = vsel %vm256, %v257, %v253
        %v259 = vadd.s32 %v254, %v258
        %v260 = vadd.s32 %v259, 536870912
        %v261 = vshrl.u32 %v260, 30
        %v262 = vshll.u32 %v261, 30
        %v263 = vsub.s32 %v259, %v262
        %vm264 = vcmp.lt.s32.totalorder %v263, 0
        %v265 = vsub.s32 0, %v263
        %v266 = vsel %vm264, %v265, %v263
        %v267 = vclz %v266
        %v268 = vsub.s32 %v267, 2
        %vm269 = vcmp.gt.s32.totalorder 0, %v268
        %v270 = vsel %vm269, 0, %v268
        %v271 = vsub.s32 32, %v270
        %v272 = vshll.u32 %v263, %v270
        %v273 = vshrl.u32 %v255, %v271
        %v274 = vor.u32 %v272, %v273
        %v275 = vsub.s32 4294967266, %v270
        %v276 = vadd.s32 %v275, 127
        %v277 = vshll.u32 %v276, 23
        %v278 = vor.u32 4788187, %v277
        %v279 = vand.u32 2147483647, %v278
        %v281 = vcvt.s32.f32 %v274
        %v282 = vmul.f32 %v281, %v279
        %v283 = vxor.u32 %v282, 2147483648
        %v284 = vsel %vm201, %v283, %v282
        %v285 = vsub.s32 4, %v261
        %v286 = vsel %vm201, %v285, %v261
        %v287 = vsel %vm200, %v198, %v284
        %v288 = vsel %vm200, 0, %v286
        %v289 = vcosq.f32.pop %v287
        %v290 = vsinq.f32.pop %v287
        %vm291 = vweird.f32 %v198
        %v292 = vadd.s32 %v288, 3
        %v293 = vand.u32 %v292, 3
        %vm294 = vcmp.lt.s32.totalorder %v293, 2
        %vm295 = vcmp.eq.s32.totalorder %v293, 0
        %v296 = vxor.u32 %v290, 2147483648
        %v297 = vsel %vm295, %v289, %v296
        %vm298 = vcmp.eq.s32.totalorder %v293, 2
        %v299 = vxor.u32 %v289, 2147483648
        %v300 = vsel %vm298, %v299, %v290
        %v301 = vsel %vm294, %v297, %v300
        %v302 = vsel %vm291, nan, %v301
        %v303 = vmul.f32 %v302, 2.0
        %v304 = vmul.f32 %v303, %v302
        %v305 = vsub.f32 1.0, %v304
        %v306 = vsub.f32 0.0, %v302
        %v307 = vmul.f32 %v302, 0.63661975
        %v308 = vpack.c.bf16 %v307, %v307
        %v309 = vld [vmem:[#allocation3] sm:$0xf]
        %v310 = vld [vmem:[#allocation3 + $0x4] sm:$0xf]
        %v311 = vld [vmem:[#allocation3 + $0x8] sm:$0xf]
        %v312 = vld [vmem:[#allocation3 + $0xc] sm:$0xf]
        %v313 = vld [vmem:[#allocation3 + $0x10] sm:$0xf]
        %v314 = vld [vmem:[#allocation3 + $0x14] sm:$0xf]
        %v315 = vld [vmem:[#allocation3 + $0x18] sm:$0xf]
        %v316 = vld [vmem:[#allocation3 + $0x1c] sm:$0xf]
        %v317 = vld [vmem:[#allocation3 + $0x20] sm:$0xf]
        %v318 = vld [vmem:[#allocation3 + $0x24] sm:$0xf]
        %v319 = vld [vmem:[#allocation3 + $0x28] sm:$0xf]
        %v320 = vld [vmem:[#allocation3 + $0x2c] sm:$0xf]
        %v321 = vld [vmem:[#allocation3 + $0x30] sm:$0xf]
        %v322 = vld [vmem:[#allocation3 + $0x34] sm:$0xf]
        %v323 = vld [vmem:[#allocation3 + $0x38] sm:$0xf]
        %v324 = vld [vmem:[#allocation3 + $0x3c] sm:$0xf]
        %v325 = vmul.f32 %v305, 2.0
        %v326 = vmul.f32 %v325, %v302
        %v327 = vsub.f32 %v326, %v306
        %v328 = vmul.f32 %v327, 0.21220659
        %v329 = vpack.c.bf16 %v328, %v328
        %s330 = scalar_lea.vmem [#allocation3], 64
        %v331 = vld [vmem:[%s330] sm:$0xf]
        %v332 = vld [vmem:[%s330 + $0x4] sm:$0xf]
        %v333 = vld [vmem:[%s330 + $0x8] sm:$0xf]
        %v334 = vld [vmem:[%s330 + $0xc] sm:$0xf]
        %v335 = vld [vmem:[%s330 + $0x10] sm:$0xf]
        %v336 = vld [vmem:[%s330 + $0x14] sm:$0xf]
        %v337 = vld [vmem:[%s330 + $0x18] sm:$0xf]
        %v338 = vld [vmem:[%s330 + $0x1c] sm:$0xf]
        %v339 = vld [vmem:[%s330 + $0x20] sm:$0xf]
        %v340 = vld [vmem:[%s330 + $0x24] sm:$0xf]
        %v341 = vld [vmem:[%s330 + $0x28] sm:$0xf]
        %v342 = vld [vmem:[%s330 + $0x2c] sm:$0xf]
        %v343 = vld [vmem:[%s330 + $0x30] sm:$0xf]
        %v344 = vld [vmem:[%s330 + $0x34] sm:$0xf]
        %v345 = vld [vmem:[%s330 + $0x38] sm:$0xf]
        %v346 = vld [vmem:[%s330 + $0x3c] sm:$0xf]
        %v363 = vunpack.c.l.b16 %v331
        %v364 = vunpack.c.l.b16 %v332
        %v365 = vunpack.c.l.b16 %v333
        %v366 = vunpack.c.l.b16 %v334
        %v367 = vunpack.c.l.b16 %v335
        %v368 = vunpack.c.l.b16 %v336
        %v369 = vunpack.c.l.b16 %v337
        %v370 = vunpack.c.l.b16 %v338
        %v371 = vunpack.c.l.b16 %v339
        %v372 = vunpack.c.l.b16 %v340
        %v373 = vunpack.c.l.b16 %v341
        %v374 = vunpack.c.l.b16 %v342
        %v375 = vunpack.c.l.b16 %v343
        %v376 = vunpack.c.l.b16 %v344
        %v377 = vunpack.c.l.b16 %v345
        %v378 = vunpack.c.l.b16 %v346
        %v379 = vpack.c.b16 %v364, %v363
        %v380 = vpack.c.b16 %v366, %v365
        %v381 = vpack.c.b16 %v368, %v367
        %v382 = vpack.c.b16 %v370, %v369
        %v383 = vpack.c.b16 %v372, %v371
        %v384 = vpack.c.b16 %v374, %v373
        %v385 = vpack.c.b16 %v376, %v375
        %v386 = vpack.c.b16 %v378, %v377
        %395 = vmatprep.subr.bf16.mxu0 0
        %396 = vmatpush1.bf16.msra.mxu0 %v379
        %397 = vmatprep.subr.bf16.mxu0 0
        %398 = vmatpush1.bf16.msra.mxu0 %v380
        %399 = vmatprep.subr.bf16.mxu0 0
        %400 = vmatpush1.bf16.msra.mxu0 %v381
        %401 = vmatprep.subr.bf16.mxu0 0
        %402 = vmatpush1.bf16.msra.mxu0 %v382
        %403 = vmatprep.subr.bf16.mxu0 0
        %404 = vmatpush1.bf16.msra.mxu0 %v383
        %405 = vmatprep.subr.bf16.mxu0 0
        %406 = vmatpush1.bf16.msra.mxu0 %v384
        %407 = vmatprep.subr.bf16.mxu0 0
        %408 = vmatpush1.bf16.msra.mxu0 %v385
        %409 = vmatprep.subr.bf16.mxu0 0
        %410 = vmatpush1.bf16.msra.mxu0 %v386
        %411 = vmatprep.subr.bf16.mxu0 0
        %412 = vmatpush1.bf16.msra.mxu0 0
        %413 = vmatprep.subr.bf16.mxu0 0
        %414 = vmatpush1.bf16.msra.mxu0 0
        %415 = vmatprep.subr.bf16.mxu0 0
        %416 = vmatpush1.bf16.msra.mxu0 0
        %417 = vmatprep.subr.bf16.mxu0 0
        %418 = vmatpush1.bf16.msra.mxu0 0
        %419 = vmatprep.subr.bf16.mxu0 0
        %420 = vmatpush1.bf16.msra.mxu0 0
        %421 = vmatprep.subr.bf16.mxu0 0
        %422 = vmatpush1.bf16.msra.mxu0 0
        %423 = vmatprep.subr.bf16.mxu0 0
        %424 = vmatpush1.bf16.msra.mxu0 0
        %425 = vmatprep.subr.bf16.mxu0 0
        %426 = vmatpush1.bf16.msra.mxu0 0
        %427 = vmatprep.mubr.bf16.mxu0 0
        %428 = vmatmul.mubr.bf16.gmra.mrb[0].mxu0 %v329
        %v429 = vpop.f32.mrb[0].mxu0
        %v430 = vadd.f32 0.0, %v429
        %v431 = vpop.f32.mrb[0].mxu0
        %v432 = vpop.f32.mrb[0].mxu0
        %v433 = vpop.f32.mrb[0].mxu0
        %434 = vdwg.mxu0
        %v451 = vunpack.c.l.b16 %v309
        %v452 = vunpack.c.l.b16 %v310
        %v453 = vunpack.c.l.b16 %v311
        %v454 = vunpack.c.l.b16 %v312
        %v455 = vunpack.c.l.b16 %v313
        %v456 = vunpack.c.l.b16 %v314
        %v457 = vunpack.c.l.b16 %v315
        %v458 = vunpack.c.l.b16 %v316
        %v459 = vunpack.c.l.b16 %v317
        %v460 = vunpack.c.l.b16 %v318
        %v461 = vunpack.c.l.b16 %v319
        %v462 = vunpack.c.l.b16 %v320
        %v463 = vunpack.c.l.b16 %v321
        %v464 = vunpack.c.l.b16 %v322
        %v465 = vunpack.c.l.b16 %v323
        %v466 = vunpack.c.l.b16 %v324
        %v467 = vpack.c.b16 %v452, %v451
        %v468 = vpack.c.b16 %v454, %v453
        %v469 = vpack.c.b16 %v456, %v455
        %v470 = vpack.c.b16 %v458, %v457
        %v471 = vpack.c.b16 %v460, %v459
        %v472 = vpack.c.b16 %v462, %v461
        %v473 = vpack.c.b16 %v464, %v463
        %v474 = vpack.c.b16 %v466, %v465
        %483 = vmatprep.subr.bf16.mxu0 0
        %484 = vmatpush1.bf16.msra.mxu0 %v467
        %485 = vmatprep.subr.bf16.mxu0 0
        %486 = vmatpush1.bf16.msra.mxu0 %v468
        %487 = vmatprep.subr.bf16.mxu0 0
        %488 = vmatpush1.bf16.msra.mxu0 %v469
        %489 = vmatprep.subr.bf16.mxu0 0
        %490 = vmatpush1.bf16.msra.mxu0 %v470
        %491 = vmatprep.subr.bf16.mxu0 0
        %492 = vmatpush1.bf16.msra.mxu0 %v471
        %493 = vmatprep.subr.bf16.mxu0 0
        %494 = vmatpush1.bf16.msra.mxu0 %v472
        %495 = vmatprep.subr.bf16.mxu0 0
        %496 = vmatpush1.bf16.msra.mxu0 %v473
        %497 = vmatprep.subr.bf16.mxu0 0
        %498 = vmatpush1.bf16.msra.mxu0 %v474
        %499 = vmatprep.subr.bf16.mxu0 0
        %500 = vmatpush1.bf16.msra.mxu0 0
        %501 = vmatprep.subr.bf16.mxu0 0
        %502 = vmatpush1.bf16.msra.mxu0 0
        %503 = vmatprep.subr.bf16.mxu0 0
        %504 = vmatpush1.bf16.msra.mxu0 0
        %505 = vmatprep.subr.bf16.mxu0 0
        %506 = vmatpush1.bf16.msra.mxu0 0
        %507 = vmatprep.subr.bf16.mxu0 0
        %508 = vmatpush1.bf16.msra.mxu0 0
        %509 = vmatprep.subr.bf16.mxu0 0
        %510 = vmatpush1.bf16.msra.mxu0 0
        %511 = vmatprep.subr.bf16.mxu0 0
        %512 = vmatpush1.bf16.msra.mxu0 0
        %513 = vmatprep.subr.bf16.mxu0 0
        %514 = vmatpush1.bf16.msra.mxu0 0
        %515 = vmatprep.mubr.bf16.mxu0 0
        %516 = vmatmul.mubr.bf16.gmra.mrb[0].mxu0 %v308
        %v517 = vpop.f32.mrb[0].mxu0
        %v518 = vadd.f32 %v430, %v517
        %v519 = vpop.f32.mrb[0].mxu0
        %v520 = vpop.f32.mrb[0].mxu0
        %v521 = vpop.f32.mrb[0].mxu0
        %522 = vdwg.mxu0
        %v523 = vmul.f32 %v325, %v327
        %v524 = vsub.f32 %v523, %v302
        %v525 = vmul.f32 %v524, 0.12732396
        %v526 = vpack.c.bf16 %v525, %v525
        %s527 = scalar_lea.vmem [#allocation3], 128
        %v528 = vld [vmem:[%s527] sm:$0xf]
        %v529 = vld [vmem:[%s527 + $0x4] sm:$0xf]
        %v530 = vld [vmem:[%s527 + $0x8] sm:$0xf]
        %v531 = vld [vmem:[%s527 + $0xc] sm:$0xf]
        %v532 = vld [vmem:[%s527 + $0x10] sm:$0xf]
        %v533 = vld [vmem:[%s527 + $0x14] sm:$0xf]
        %v534 = vld [vmem:[%s527 + $0x18] sm:$0xf]
        %v535 = vld [vmem:[%s527 + $0x1c] sm:$0xf]
        %v536 = vld [vmem:[%s527 + $0x20] sm:$0xf]
        %v537 = vld [vmem:[%s527 + $0x24] sm:$0xf]
        %v538 = vld [vmem:[%s527 + $0x28] sm:$0xf]
        %v539 = vld [vmem:[%s527 + $0x2c] sm:$0xf]
        %v540 = vld [vmem:[%s527 + $0x30] sm:$0xf]
        %v541 = vld [vmem:[%s527 + $0x34] sm:$0xf]
        %v542 = vld [vmem:[%s527 + $0x38] sm:$0xf]
        %v543 = vld [vmem:[%s527 + $0x3c] sm:$0xf]
        %v560 = vunpack.c.l.b16 %v528
        %v561 = vunpack.c.l.b16 %v529
        %v562 = vunpack.c.l.b16 %v530
        %v563 = vunpack.c.l.b16 %v531
        %v564 = vunpack.c.l.b16 %v532
        %v565 = vunpack.c.l.b16 %v533
        %v566 = vunpack.c.l.b16 %v534
        %v567 = vunpack.c.l.b16 %v535
        %v568 = vunpack.c.l.b16 %v536
        %v569 = vunpack.c.l.b16 %v537
        %v570 = vunpack.c.l.b16 %v538
        %v571 = vunpack.c.l.b16 %v539
        %v572 = vunpack.c.l.b16 %v540
        %v573 = vunpack.c.l.b16 %v541
        %v574 = vunpack.c.l.b16 %v542
        %v575 = vunpack.c.l.b16 %v543
        %v576 = vpack.c.b16 %v561, %v560
        %v577 = vpack.c.b16 %v563, %v562
        %v578 = vpack.c.b16 %v565, %v564
        %v579 = vpack.c.b16 %v567, %v566
        %v580 = vpack.c.b16 %v569, %v568
        %v581 = vpack.c.b16 %v571, %v570
        %v582 = vpack.c.b16 %v573, %v572
        %v583 = vpack.c.b16 %v575, %v574
        %592 = vmatprep.subr.bf16.mxu0 0
        %593 = vmatpush1.bf16.msra.mxu0 %v576
        %594 = vmatprep.subr.bf16.mxu0 0
        %595 = vmatpush1.bf16.msra.mxu0 %v577
        %596 = vmatprep.subr.bf16.mxu0 0
        %597 = vmatpush1.bf16.msra.mxu0 %v578
        %598 = vmatprep.subr.bf16.mxu0 0
        %599 = vmatpush1.bf16.msra.mxu0 %v579
        %600 = vmatprep.subr.bf16.mxu0 0
        %601 = vmatpush1.bf16.msra.mxu0 %v580
        %602 = vmatprep.subr.bf16.mxu0 0
        %603 = vmatpush1.bf16.msra.mxu0 %v581
        %604 = vmatprep.subr.bf16.mxu0 0
        %605 = vmatpush1.bf16.msra.mxu0 %v582
        %606 = vmatprep.subr.bf16.mxu0 0
        %607 = vmatpush1.bf16.msra.mxu0 %v583
        %608 = vmatprep.subr.bf16.mxu0 0
        %609 = vmatpush1.bf16.msra.mxu0 0
        %610 = vmatprep.subr.bf16.mxu0 0
        %611 = vmatpush1.bf16.msra.mxu0 0
        %612 = vmatprep.subr.bf16.mxu0 0
        %613 = vmatpush1.bf16.msra.mxu0 0
        %614 = vmatprep.subr.bf16.mxu0 0
        %615 = vmatpush1.bf16.msra.mxu0 0
        %616 = vmatprep.subr.bf16.mxu0 0
        %617 = vmatpush1.bf16.msra.mxu0 0
        %618 = vmatprep.subr.bf16.mxu0 0
        %619 = vmatpush1.bf16.msra.mxu0 0
        %620 = vmatprep.subr.bf16.mxu0 0
        %621 = vmatpush1.bf16.msra.mxu0 0
        %622 = vmatprep.subr.bf16.mxu0 0
        %623 = vmatpush1.bf16.msra.mxu0 0
        %624 = vmatprep.mubr.bf16.mxu0 0
        %625 = vmatmul.mubr.bf16.gmra.mrb[0].mxu0 %v526
        %v626 = vpop.f32.mrb[0].mxu0
        %v627 = vadd.f32 0.0, %v626
        %v628 = vpop.f32.mrb[0].mxu0
        %v629 = vpop.f32.mrb[0].mxu0
        %v630 = vpop.f32.mrb[0].mxu0
        %631 = vdwg.mxu0
        %v632 = vadd.f32 %v518, %v627
        %633 = vst.msk [vmem:[%s191] sm:$0xff] %vm195, %v632
        %v634 = vmul.f32 %v632, %v632
        %v635 = vadd.f32 %v634, 0.0
        %v636 = vadd.f32 %v635, 0.0
        %637 = vst [vmem:[%s183] sm:$0xff] %v636
        %p638 = scmp.lt.s32.totalorder %s19, 3
        %s639 = scalar_select %p638, %s19, 3
        %s640 = smul.addr %s639, 8
        %s641 = scalar_lea.vmem %s2, %s640
        %s642 = sand.u32 %s100, 1
        %s643 = scalar_lea.sflag [#allocation5], %s642
        %s644 = sand.u32 %s100, 1
        %s645 = smul.addr %s644, 8
        %s646 = scalar_lea.vmem [#allocation6], %s645
        // Predicated region
        $region33: #{tpu_custom_call.1} parent=27 // pred_check
          %p647 = pneg %p84
        $region34: #{tpu_custom_call.1} parent=27 // pred_check_branch
          %649 = sbr.rel (%p647) target = $region36
        $region35: #{tpu_custom_call.1} parent=27 // pred_region
          _
        $region36: #{tpu_custom_call.1} parent=27 // pred_fallthru
          _
        // Predicated region
        $region37: #{tpu_custom_call.1} parent=27 // pred_check
          %p650 = pneg %p110
        $region38: #{tpu_custom_call.1} parent=27 // pred_check_branch
          %652 = sbr.rel (%p650) target = $region40
        $region39: #{tpu_custom_call.1} parent=27 // pred_region
          %s654 = ssub.s32 128, 128
          %655 = vsyncadd %s643, %s654
          %s656 = smul.addr %s19, 128
          %s657 = scalar_lea.hbm %s3, %s656
          %s659 = sshll.u32 %s646, 4
          %s660 = int_to_ptr.vmem [resolvable:$true] %s659
          %662 = dma.vmem_to_hbm [thread:$0]  %s660, 128, %s657, %s643
        $region40: #{tpu_custom_call.1} parent=27 // pred_fallthru
          _
      $region28: #{tpu_custom_call.1} parent=5 // pred_fallthru
        _
      %p663 = scmp.le.s32.totalorder 2, %s14
      // Predicated region
      $region41: #{tpu_custom_call.1} parent=5 // pred_check
        %p664 = pneg %p663
      $region42: #{tpu_custom_call.1} parent=5 // pred_check_branch
        %666 = sbr.rel (%p664) target = $region44
      $region43: #{tpu_custom_call.1} parent=5 // pred_region
        %s667 = ssub.s32 %s14, 2
        // Predicated region
        $region45: #{tpu_custom_call.1} parent=43 // pred_check
          %p668 = pneg %p90
        $region46: #{tpu_custom_call.1} parent=43 // pred_check_branch
          %670 = sbr.rel (%p668) target = $region48
        $region47: #{tpu_custom_call.1} parent=43 // pred_region
          %p671 = scmp.lt.s32.totalorder %s20, 3
          %s672 = scalar_select %p671, %s20, 3
          %s673 = smul.addr %s672, 8
          %s674 = scalar_lea.vmem %s2, %s673
        $region48: #{tpu_custom_call.1} parent=43 // pred_fallthru
          _
        // Predicated region
        $region49: #{tpu_custom_call.1} parent=43 // pred_check
          %p675 = pneg %p116
        $region50: #{tpu_custom_call.1} parent=43 // pred_check_branch
          %677 = sbr.rel (%p675) target = $region52
        $region51: #{tpu_custom_call.1} parent=43 // pred_region
          %s678 = sand.u32 %s101, 1
          %s679 = scalar_lea.sflag [#allocation5], %s678
          %s680 = sand.u32 %s101, 1
          %s681 = smul.addr %s680, 8
          %s682 = scalar_lea.vmem [#allocation6], %s681
          %683 = dma.done %s679, 128
        $region52: #{tpu_custom_call.1} parent=43 // pred_fallthru
          _
      $region44: #{tpu_custom_call.1} parent=5 // pred_fallthru
        _
    $region6: #{tpu_custom_call.1} parent=1 // loop_footer
      %s18 = sadd.s32 1, %s14
    $region7: #{tpu_custom_call.1} parent=1 // loop_footer_branch
      %13 = sbr.rel target = $region3
    $region8: #{tpu_custom_call.1} parent=1 // loop_exit
      _
    %684 = vsyncpa [#allocation4], 1
    %s685 = scalar_lea.sflag [#allocation4], 1
    %686 = vsyncpa %s685, 1
    %687 = vsyncpa [#allocation5], 1
    %s688 = scalar_lea.sflag [#allocation5], 1
    %689 = vsyncpa %s688, 1

</llo_original>
